<compile_context>
chip_gen: v5e
topology: v5e:2x2
jax: 0.10.0
libtpu: 0.0.40
codegen_flags: <defaults>
</compile_context>

<pallas_src>
import functools

import jax
import jax.numpy as jnp
from jax.experimental import pallas as pl
from jax.experimental.pallas import tpu as pltpu

_LANES = 128
_MAX_ROW_TILE = 2048  # 2048 rows * 128 lanes * 4 B = 1 MiB per f32 input block


def _dice_partial_kernel(pred_ref, target_ref, num_ref, den_ref, *,
                         rt, d, acc_rows, needs_mask):
    """Accumulate per-sample lane-partial sums of p*t and p+t.

    pred_ref/target_ref : (rt, 128) feature slab of one sample
    num_ref/den_ref     : (acc_rows, 128) resident accumulators (outputs)
    """
    k = pl.program_id(1)

    @pl.when(k == 0)
    def _():
        num_ref[...] = jnp.zeros_like(num_ref)
        den_ref[...] = jnp.zeros_like(den_ref)

    p = jax.nn.sigmoid(pred_ref[...].astype(jnp.float32))   # (rt, 128)
    t = target_ref[...].astype(jnp.float32)

    if needs_mask:
        # Zero out lane-padding and (possible) out-of-bounds rows of a partial
        # last tile.  jnp.where (select) is safe even if the OOB region holds
        # NaN/Inf garbage.
        row = jax.lax.broadcasted_iota(jnp.int32, (rt, _LANES), 0)
        lane = jax.lax.broadcasted_iota(jnp.int32, (rt, _LANES), 1)
        valid = (k * rt + row) * _LANES + lane < d
        p = jnp.where(valid, p, 0.0)
        t = jnp.where(valid, t, 0.0)

    prod = p * t          # numerator terms
    ssum = p + t          # denominator terms (p == 1 -> no pow needed)

    if acc_rows == 8:
        # Fold row groups with plain VPU vreg adds; no cross-lane reduce here.
        num_ref[...] += prod.reshape(rt // 8, 8, _LANES).sum(axis=0)
        den_ref[...] += ssum.reshape(rt // 8, 8, _LANES).sum(axis=0)
    else:
        # Tiny-D fallback (rt < 8 rows or not a multiple of 8).
        num_ref[...] += jnp.sum(prod, axis=0, keepdims=True)
        den_ref[...] += jnp.sum(ssum, axis=0, keepdims=True)


def dice_loss(pred, target, merge="mean", smooth=1.0):
    """Pallas implementation of DiceLoss.forward (p=1, smooth=1)."""
    if merge not in ("mean", "sum"):
        raise Exception("Merging mode not implemented")

    n = pred.shape[0]
    pred2 = pred.reshape(n, -1)
    target2 = target.reshape(n, -1)
    d = pred2.shape[1]

    r = pl.cdiv(d, _LANES)
    d_pad = r * _LANES
    if d_pad != d:
        # TODO(synk): ragged last lane-chunk; a fully pad-free path would need
        # manual DMA / pl.BoundedSlice.  Zero-pad (masked in-kernel), which is
        # dtype-safe unlike the previous -1e30 sigmoid-overflow trick.
        pred2 = jnp.pad(pred2, ((0, 0), (0, d_pad - d)))
        target2 = jnp.pad(target2, ((0, 0), (0, d_pad - d)))
    pred3 = pred2.reshape(n, r, _LANES)
    target3 = target2.reshape(n, r, _LANES)

    rt = min(r, _MAX_ROW_TILE)          # rt == r (full dim) or a multiple of 8
    n_row_tiles = pl.cdiv(r, rt)
    acc_rows = 8 if rt % 8 == 0 else 1
    needs_mask = (d_pad != d) or (r % rt != 0)

    kernel = functools.partial(
        _dice_partial_kernel, rt=rt, d=d, acc_rows=acc_rows,
        needs_mask=needs_mask)

    num_out, den_out = pl.pallas_call(
        kernel,
        out_shape=(
            jax.ShapeDtypeStruct((n, acc_rows, _LANES), jnp.float32),
            jax.ShapeDtypeStruct((n, acc_rows, _LANES), jnp.float32),
        ),
        grid_spec=pltpu.PrefetchScalarGridSpec(
            num_scalar_prefetch=0,
            grid=(n, n_row_tiles),
            in_specs=[
                pl.BlockSpec((None, rt, _LANES), lambda b, k: (b, k, 0)),
                pl.BlockSpec((None, rt, _LANES), lambda b, k: (b, k, 0)),
            ],
            out_specs=[
                pl.BlockSpec((None, acc_rows, _LANES), lambda b, k: (b, 0, 0)),
                pl.BlockSpec((None, acc_rows, _LANES), lambda b, k: (b, 0, 0)),
            ],
        ),
        compiler_params=pltpu.CompilerParams(
            dimension_semantics=("parallel", "arbitrary"),
            vmem_limit_bytes=32 * 1024 * 1024),
    )(pred3, target3)

    # Final cross-lane reduce + dice + merge on tiny (N, acc_rows*128) arrays.
    num = 2.0 * jnp.sum(num_out.reshape(n, -1), axis=1) + smooth
    den = jnp.sum(den_out.reshape(n, -1), axis=1) + smooth
    loss = 1.0 - num / den
    return jnp.mean(loss) if merge == "mean" else jnp.sum(loss)


def _dice_loss_ref(pred, target, merge="mean", smooth=1.0):
    n = pred.shape[0]
    p = jax.nn.sigmoid(pred).reshape(n, -1)
    t = target.reshape(n, -1)
    num = 2.0 * jnp.sum(p * t, axis=1) + smooth
    den = jnp.sum(p + t, axis=1) + smooth
    loss = 1.0 - num / den
    return jnp.mean(loss) if merge == "mean" else jnp.sum(loss)


if __name__ == "__main__":
    key = jax.random.PRNGKey(0)

    # Case 1: canonical NCHW logits/mask, D = 4*16*16 = 1024 (no padding path).
    k1, k2, key = jax.random.split(key, 3)
    pred = jax.random.normal(k1, (2, 4, 16, 16), dtype=jnp.float32)
    target = jax.random.bernoulli(k2, 0.4, (2, 4, 16, 16)).astype(jnp.float32)
    out = jax.block_until_ready(dice_loss(pred, target, merge="mean"))
    ref = _dice_loss_ref(pred, target, merge="mean")
    assert jnp.allclose(out, ref, atol=1e-5, rtol=1e-5), (out, ref)

    out_s = jax.block_until_ready(dice_loss(pred, target, merge="sum"))
    ref_s = _dice_loss_ref(pred, target, merge="sum")
    assert jnp.allclose(out_s, ref_s, atol=1e-5, rtol=1e-5), (out_s, ref_s)

    # Case 2: ragged feature count (D = 3*7*9 = 189) -> exercises the
    # in-kernel validity mask (no -1e30 trick).
    k1, k2, key = jax.random.split(key, 3)
    pred_r = jax.random.normal(k1, (2, 3, 7, 9), dtype=jnp.float32)
    target_r = jax.random.bernoulli(k2, 0.5, (2, 3, 7, 9)).astype(jnp.float32)
    out_r = jax.block_until_ready(dice_loss(pred_r, target_r, merge="mean"))
    ref_r = _dice_loss_ref(pred_r, target_r, merge="mean")
    assert jnp.allclose(out_r, ref_r, atol=1e-5, rtol=1e-5), (out_r, ref_r)

    # Case 3: large D (8*256*256 = 524288) -> multiple row tiles along the
    # "arbitrary" reduction axis (tests accumulator reset/carry).
    k1, k2, key = jax.random.split(key, 3)
    pred_l = jax.random.normal(k1, (2, 8, 256, 256), dtype=jnp.float32)
    target_l = jax.random.bernoulli(k2, 0.3, (2, 8, 256, 256)).astype(jnp.float32)
    out_l = jax.block_until_ready(dice_loss(pred_l, target_l, merge="mean"))
    ref_l = _dice_loss_ref(pred_l, target_l, merge="mean")
    assert jnp.allclose(out_l, ref_l, atol=1e-4, rtol=1e-4), (out_l, ref_l)

    print("KERNEL_OK")
</pallas_src>

<mosaic_0001>
module attributes {stable_mosaic.version = 11 : i64} {
  func.func @_dice_partial_kernel(%arg0: i32, %arg1: i32, %arg2: memref<1x8x128xf32, #tpu.memory_space<vmem>>, %arg3: memref<1x8x128xf32, #tpu.memory_space<vmem>>, %arg4: memref<1x8x128xf32, #tpu.memory_space<vmem>>, %arg5: memref<1x8x128xf32, #tpu.memory_space<vmem>>) attributes {dimension_semantics = [#tpu.dimension_semantics<parallel>, #tpu.dimension_semantics<arbitrary>], iteration_bounds = array<i64: 2, 1>, scalar_prefetch = 0 : i64, scratch_operands = 0 : i64, tpu.core_type = #tpu.core_type<tc>, window_params = [{transform_indices = @transform_0, window_bounds = array<i64: 1, 8, 128>}, {transform_indices = @transform_1, window_bounds = array<i64: 1, 8, 128>}, {transform_indices = @transform_2, window_bounds = array<i64: 1, 8, 128>}, {transform_indices = @transform_3, window_bounds = array<i64: 1, 8, 128>}]} {
    %c0_i32 = arith.constant 0 : i32
    %0 = arith.cmpi eq, %arg1, %c0_i32 : i32
    %1 = arith.extui %0 : i1 to i32
    %c0_i32_0 = arith.constant 0 : i32
    %2 = arith.cmpi ne, %1, %c0_i32_0 : i32
    scf.if %2 {
      %cst_20 = arith.constant 0.000000e+00 : f32
      %30 = vector.broadcast %cst_20 : f32 to vector<8x128xf32>
      %c0_21 = arith.constant 0 : index
      %c0_22 = arith.constant 0 : index
      %c0_23 = arith.constant 0 : index
      %31 = vector.load %arg4[%c0_21, %c0_22, %c0_23] : memref<1x8x128xf32, #tpu.memory_space<vmem>>, vector<1x8x128xf32>
      %32 = vector.shape_cast %31 : vector<1x8x128xf32> to vector<8x128xf32>
      %33 = vector.shape_cast %30 : vector<8x128xf32> to vector<1x8x128xf32>
      tpu.vector_store %arg4[%c0_21, %c0_22, %c0_23], %33 {strides = array<i32>} : memref<1x8x128xf32, #tpu.memory_space<vmem>>, vector<1x8x128xf32>,
      %cst_24 = arith.constant 0.000000e+00 : f32
      %34 = vector.broadcast %cst_24 : f32 to vector<8x128xf32>
      %c0_25 = arith.constant 0 : index
      %c0_26 = arith.constant 0 : index
      %c0_27 = arith.constant 0 : index
      %35 = vector.load %arg5[%c0_25, %c0_26, %c0_27] : memref<1x8x128xf32, #tpu.memory_space<vmem>>, vector<1x8x128xf32>
      %36 = vector.shape_cast %35 : vector<1x8x128xf32> to vector<8x128xf32>
      %37 = vector.shape_cast %34 : vector<8x128xf32> to vector<1x8x128xf32>
      tpu.vector_store %arg5[%c0_25, %c0_26, %c0_27], %37 {strides = array<i32>} : memref<1x8x128xf32, #tpu.memory_space<vmem>>, vector<1x8x128xf32>,
    } else {
    }
    %c0 = arith.constant 0 : index
    %c0_1 = arith.constant 0 : index
    %c0_2 = arith.constant 0 : index
    %3 = vector.load %arg2[%c0, %c0_1, %c0_2] : memref<1x8x128xf32, #tpu.memory_space<vmem>>, vector<1x8x128xf32>
    %4 = vector.shape_cast %3 : vector<1x8x128xf32> to vector<8x128xf32>
    %5 = arith.negf %4 : vector<8x128xf32>
    %6 = math.exp %5 : vector<8x128xf32>
    %cst = arith.constant 1.000000e+00 : f32
    %7 = vector.broadcast %cst : f32 to vector<8x128xf32>
    %8 = arith.addf %7, %6 : vector<8x128xf32>
    %9 = arith.divf %7, %8 : vector<8x128xf32>
    %c0_3 = arith.constant 0 : index
    %c0_4 = arith.constant 0 : index
    %c0_5 = arith.constant 0 : index
    %10 = vector.load %arg3[%c0_3, %c0_4, %c0_5] : memref<1x8x128xf32, #tpu.memory_space<vmem>>, vector<1x8x128xf32>
    %11 = vector.shape_cast %10 : vector<1x8x128xf32> to vector<8x128xf32>
    %12 = arith.mulf %9, %11 : vector<8x128xf32>
    %13 = arith.addf %9, %11 : vector<8x128xf32>
    %c0_6 = arith.constant 0 : index
    %c0_7 = arith.constant 0 : index
    %c0_8 = arith.constant 0 : index
    %14 = vector.load %arg4[%c0_6, %c0_7, %c0_8] : memref<1x8x128xf32, #tpu.memory_space<vmem>>, vector<1x8x128xf32>
    %15 = vector.shape_cast %14 : vector<1x8x128xf32> to vector<8x128xf32>
    %16 = vector.shape_cast %12 : vector<8x128xf32> to vector<1x8x128xf32>
    %cst_9 = arith.constant dense<0.000000e+00> : vector<8x128xf32>
    %17 = vector.multi_reduction <add>, %16, %cst_9 [0] : vector<1x8x128xf32> to vector<8x128xf32>
    %18 = arith.addf %15, %17 : vector<8x128xf32>
    %c0_10 = arith.constant 0 : index
    %c0_11 = arith.constant 0 : index
    %c0_12 = arith.constant 0 : index
    %19 = vector.load %arg4[%c0_10, %c0_11, %c0_12] : memref<1x8x128xf32, #tpu.memory_space<vmem>>, vector<1x8x128xf32>
    %20 = vector.shape_cast %19 : vector<1x8x128xf32> to vector<8x128xf32>
    %21 = vector.shape_cast %18 : vector<8x128xf32> to vector<1x8x128xf32>
    tpu.vector_store %arg4[%c0_10, %c0_11, %c0_12], %21 {strides = array<i32>} : memref<1x8x128xf32, #tpu.memory_space<vmem>>, vector<1x8x128xf32>,
    %c0_13 = arith.constant 0 : index
    %c0_14 = arith.constant 0 : index
    %c0_15 = arith.constant 0 : index
    %22 = vector.load %arg5[%c0_13, %c0_14, %c0_15] : memref<1x8x128xf32, #tpu.memory_space<vmem>>, vector<1x8x128xf32>
    %23 = vector.shape_cast %22 : vector<1x8x128xf32> to vector<8x128xf32>
    %24 = vector.shape_cast %13 : vector<8x128xf32> to vector<1x8x128xf32>
    %cst_16 = arith.constant dense<0.000000e+00> : vector<8x128xf32>
    %25 = vector.multi_reduction <add>, %24, %cst_16 [0] : vector<1x8x128xf32> to vector<8x128xf32>
    %26 = arith.addf %23, %25 : vector<8x128xf32>
    %c0_17 = arith.constant 0 : index
    %c0_18 = arith.constant 0 : index
    %c0_19 = arith.constant 0 : index
    %27 = vector.load %arg5[%c0_17, %c0_18, %c0_19] : memref<1x8x128xf32, #tpu.memory_space<vmem>>, vector<1x8x128xf32>
    %28 = vector.shape_cast %27 : vector<1x8x128xf32> to vector<8x128xf32>
    %29 = vector.shape_cast %26 : vector<8x128xf32> to vector<1x8x128xf32>
    tpu.vector_store %arg5[%c0_17, %c0_18, %c0_19], %29 {strides = array<i32>} : memref<1x8x128xf32, #tpu.memory_space<vmem>>, vector<1x8x128xf32>,
    return
  }
  func.func @transform_0(%arg0: i32, %arg1: i32) -> (i32, i32, i32) {
    %c0_i32 = arith.constant 0 : i32
    %c0_i32_0 = arith.constant 0 : i32
    return %arg0, %arg1, %c0_i32 : i32, i32, i32
  }
  func.func @transform_1(%arg0: i32, %arg1: i32) -> (i32, i32, i32) {
    %c0_i32 = arith.constant 0 : i32
    %c0_i32_0 = arith.constant 0 : i32
    return %arg0, %arg1, %c0_i32 : i32, i32, i32
  }
  func.func @transform_2(%arg0: i32, %arg1: i32) -> (i32, i32, i32) {
    %c0_i32 = arith.constant 0 : i32
    %c0_i32_0 = arith.constant 0 : i32
    %c0_i32_1 = arith.constant 0 : i32
    return %arg0, %c0_i32, %c0_i32_0 : i32, i32, i32
  }
  func.func @transform_3(%arg0: i32, %arg1: i32) -> (i32, i32, i32) {
    %c0_i32 = arith.constant 0 : i32
    %c0_i32_0 = arith.constant 0 : i32
    %c0_i32_1 = arith.constant 0 : i32
    return %arg0, %c0_i32, %c0_i32_0 : i32, i32, i32
  }
}

</mosaic_0001>

<llo_original>
// kernel: tpu_custom_call.1
$region0: #{tpu_custom_call.1}
  #allocation0 [shape = 'u32[]', space=smem, size = 0x4, offset = 0x4, fixed_abs, tag = 'smem constant byte address 0x4 - core index']
  #allocation1 [shape = 'u32[72,128]{1,0:T(1,128)}', space=vmem, size = 0x9000, scoped, tag = 'internal scratch']
  %s0 = inlined_call_operand.hbm [shape: f32[2,8,128], index: 0, kind: input, shape index: {}]
  %s1 = inlined_call_operand.hbm [shape: f32[2,8,128], index: 1, kind: input, shape index: {}]
  %s2 = inlined_call_operand.hbm [shape: f32[2,8,128], index: 2, kind: output, shape index: {0}]
  %s3 = inlined_call_operand.hbm [shape: f32[2,8,128], index: 3, kind: output, shape index: {1}]
  %4 = xla_tuple %s2, %s3
  %s5 = sld [smem:[#allocation0]]
  $region61: #{tpu_custom_call.1} parent=0
    _
  %s7 = ssub.s32 1, %s5
  %s8 = scalar_select 0, %s7, %s5
  $region1: #{tpu_custom_call.1} parent=0
    #allocation2 [shape = 'u8[8192]{0}', space=vmem, size = 0x2000, scoped, tag = 'input window, operand 0']
    #allocation3 [shape = 's32[2]{0}', space=sflag, size = 0x8, scoped, tag = 'scoped memory for tpu_custom_call.1']
    #allocation4 [shape = 's32[2]{0}', space=sflag, size = 0x8, scoped, tag = 'scoped memory for tpu_custom_call.1']
    #allocation5 [shape = 'u8[8192]{0}', space=vmem, size = 0x2000, scoped, tag = 'input window, operand 1']
    #allocation6 [shape = 's32[2]{0}', space=sflag, size = 0x8, scoped, tag = 'scoped memory for tpu_custom_call.1']
    #allocation7 [shape = 'u8[8192]{0}', space=vmem, size = 0x2000, scoped, tag = 'output window, operand 0']
    #allocation8 [shape = 'u8[8192]{0}', space=vmem, size = 0x2000, scoped, tag = 'output window, operand 1']
    #allocation9 [shape = 's32[2]{0}', space=sflag, size = 0x8, scoped, tag = 'scoped memory for tpu_custom_call.1']
    %9 = vsyncpa [#allocation3], 0
    %s10 = scalar_lea.sflag [#allocation3], 1
    %11 = vsyncpa %s10, 0
    %12 = vsyncpa [#allocation6], 0
    %s13 = scalar_lea.sflag [#allocation6], 1
    %14 = vsyncpa %s13, 0
    %15 = vsyncpa [#allocation4], 0
    %s16 = scalar_lea.sflag [#allocation4], 1
    %17 = vsyncpa %s16, 0
    %18 = vsyncpa [#allocation9], 0
    %s19 = scalar_lea.sflag [#allocation9], 1
    %20 = vsyncpa %s19, 0
    loop: start=0, step=1, limit=4
    $region2: #{tpu_custom_call.1} parent=1 // loop_pre_header
      _
    $region3: #{tpu_custom_call.1} parent=1 // loop_header
      %s22 = sphi 0, %s26
      %p23 = scmp.ge.s32.totalorder %s22, 4
      %s29 = sphi 0, %s41
      %s30 = sphi 0, %s37
      %s31 = sphi 0, %s29
      %s32 = sphi 0, %s30
      %s33 = sphi 0, %s31
      %s34 = sphi 0, %s32
      %s46 = sphi 0, %s48
      %s49 = sphi 0, %s46
      %s50 = sphi 0, %s49
      %s66 = sphi 0, %s50
      %s74 = sphi 0, %s76
      %s77 = sphi 0, %s74
      %s78 = sphi 0, %s77
      %s94 = sphi 0, %s78
      %s100 = sphi 0, %s102
      %s103 = sphi 0, %s100
      %s104 = sphi 0, %s103
      %s120 = sphi 0, %s104
      %s126 = sphi 0, %s128
      %s129 = sphi 0, %s126
      %s130 = sphi 0, %s129
      %s146 = sphi 0, %s130
    $region4: #{tpu_custom_call.1} parent=1 // loop_header_branch
      %25 = sbr.rel (%p23) target = $region8
    $region5: #{tpu_custom_call.1} parent=1 // loop_body
      %s27 = ssub.s32 %s22, 1
      %s28 = ssub.s32 %s22, 2
      %s35 = sadd.s32 1, %s30
      %p36 = scmp.ge.s32.totalorder %s35, 1
      %s37 = scalar_select %p36, 0, %s35
      %s38 = sadd.s32 1, %s29
      %s39 = scalar_select %p36, %s38, %s29
      %p40 = scmp.ge.s32.totalorder %s39, 2
      %s41 = scalar_select %p40, 0, %s39
      %s42 = ssub.s32 %s29, %s41
      %s43 = ssub.s32 %s30, %s37
      %s44 = sor.u32 %s42, %s43
      %p45 = scmp.eq.s32.totalorder %s44, 0
      %s47 = sadd.s32 %s46, 1
      %s48 = scalar_select %p45, %s46, %s47
      %p51 = pneg %p45
      %p52 = scmp.eq.s32.totalorder %s22, 1
      %p53 = por %p51, %p52
      %p54 = scmp.ne.s32.totalorder %s46, %s49
      %p55 = scmp.eq.s32.totalorder %s22, 0
      %p56 = por %p54, %p55
      %p57 = scmp.ne.s32.totalorder %s46, %s49
      %p58 = scmp.eq.s32.totalorder %s27, 1
      %p59 = por %p57, %p58
      %p60 = scmp.ne.s32.totalorder %s49, %s50
      %p61 = scmp.eq.s32.totalorder %s27, 0
      %p62 = por %p60, %p61
      %p63 = scmp.ne.s32.totalorder %s49, %s50
      %p64 = scmp.eq.s32.totalorder %s28, 1
      %p65 = por %p63, %p64
      %p67 = scmp.ne.s32.totalorder %s50, %s66
      %p68 = scmp.eq.s32.totalorder %s28, 0
      %p69 = por %p67, %p68
      %s70 = ssub.s32 %s29, %s41
      %s71 = ssub.s32 %s30, %s37
      %s72 = sor.u32 %s70, %s71
      %p73 = scmp.eq.s32.totalorder %s72, 0
      %s75 = sadd.s32 %s74, 1
      %s76 = scalar_select %p73, %s74, %s75
      %p79 = pneg %p73
      %p80 = scmp.eq.s32.totalorder %s22, 1
      %p81 = por %p79, %p80
      %p82 = scmp.ne.s32.totalorder %s74, %s77
      %p83 = scmp.eq.s32.totalorder %s22, 0
      %p84 = por %p82, %p83
      %p85 = scmp.ne.s32.totalorder %s74, %s77
      %p86 = scmp.eq.s32.totalorder %s27, 1
      %p87 = por %p85, %p86
      %p88 = scmp.ne.s32.totalorder %s77, %s78
      %p89 = scmp.eq.s32.totalorder %s27, 0
      %p90 = por %p88, %p89
      %p91 = scmp.ne.s32.totalorder %s77, %s78
      %p92 = scmp.eq.s32.totalorder %s28, 1
      %p93 = por %p91, %p92
      %p95 = scmp.ne.s32.totalorder %s78, %s94
      %p96 = scmp.eq.s32.totalorder %s28, 0
      %p97 = por %p95, %p96
      %s98 = ssub.s32 %s29, %s41
      %p99 = scmp.eq.s32.totalorder %s98, 0
      %s101 = sadd.s32 %s100, 1
      %s102 = scalar_select %p99, %s100, %s101
      %p105 = pneg %p99
      %p106 = scmp.eq.s32.totalorder %s22, 1
      %p107 = por %p105, %p106
      %p108 = scmp.ne.s32.totalorder %s100, %s103
      %p109 = scmp.eq.s32.totalorder %s22, 0
      %p110 = por %p108, %p109
      %p111 = scmp.ne.s32.totalorder %s100, %s103
      %p112 = scmp.eq.s32.totalorder %s27, 1
      %p113 = por %p111, %p112
      %p114 = scmp.ne.s32.totalorder %s103, %s104
      %p115 = scmp.eq.s32.totalorder %s27, 0
      %p116 = por %p114, %p115
      %p117 = scmp.ne.s32.totalorder %s103, %s104
      %p118 = scmp.eq.s32.totalorder %s28, 1
      %p119 = por %p117, %p118
      %p121 = scmp.ne.s32.totalorder %s104, %s120
      %p122 = scmp.eq.s32.totalorder %s28, 0
      %p123 = por %p121, %p122
      %s124 = ssub.s32 %s29, %s41
      %p125 = scmp.eq.s32.totalorder %s124, 0
      %s127 = sadd.s32 %s126, 1
      %s128 = scalar_select %p125, %s126, %s127
      %p131 = pneg %p125
      %p132 = scmp.eq.s32.totalorder %s22, 1
      %p133 = por %p131, %p132
      %p134 = scmp.ne.s32.totalorder %s126, %s129
      %p135 = scmp.eq.s32.totalorder %s22, 0
      %p136 = por %p134, %p135
      %p137 = scmp.ne.s32.totalorder %s126, %s129
      %p138 = scmp.eq.s32.totalorder %s27, 1
      %p139 = por %p137, %p138
      %p140 = scmp.ne.s32.totalorder %s129, %s130
      %p141 = scmp.eq.s32.totalorder %s27, 0
      %p142 = por %p140, %p141
      %p143 = scmp.ne.s32.totalorder %s129, %s130
      %p144 = scmp.eq.s32.totalorder %s28, 1
      %p145 = por %p143, %p144
      %p147 = scmp.ne.s32.totalorder %s130, %s146
      %p148 = scmp.eq.s32.totalorder %s28, 0
      %p149 = por %p147, %p148
      %p150 = scmp.le.s32.totalorder 1, %s22
      %p151 = scmp.lt.s32.totalorder %s22, 3
      %p152 = pnand %p150, %p151
      %p153 = pneg %p152
      // Predicated region
      $region9: #{tpu_custom_call.1} parent=5 // pred_check
        _
      $region10: #{tpu_custom_call.1} parent=5 // pred_check_branch
        %155 = sbr.rel (%p152) target = $region12
      $region11: #{tpu_custom_call.1} parent=5 // pred_region
        %s156 = ssub.s32 %s22, 1
      $region12: #{tpu_custom_call.1} parent=5 // pred_fallthru
        _
      %p157 = scmp.lt.s32.totalorder %s22, 2
      // Predicated region
      $region13: #{tpu_custom_call.1} parent=5 // pred_check
        %p158 = pneg %p157
      $region14: #{tpu_custom_call.1} parent=5 // pred_check_branch
        %160 = sbr.rel (%p158) target = $region16
      $region15: #{tpu_custom_call.1} parent=5 // pred_region
        // Predicated region
        $region17: #{tpu_custom_call.1} parent=15 // pred_check
          %p161 = pneg %p56
        $region18: #{tpu_custom_call.1} parent=15 // pred_check_branch
          %163 = sbr.rel (%p161) target = $region20
        $region19: #{tpu_custom_call.1} parent=15 // pred_region
          %s164 = sand.u32 %s46, 1
          %s165 = scalar_lea.sflag [#allocation3], %s164
          %s166 = sand.u32 %s46, 1
          %s167 = smul.addr %s166, 8
          %s168 = scalar_lea.vmem [#allocation2], %s167
          %170 = vsyncadd %s165, 0
          %s171 = sadd.s32 %s30, %s29
          %s172 = smul.addr %s171, 8
          %s173 = scalar_lea.hbm %s0, %s172
          %s175 = sshll.u32 %s173, 4
          %s176 = int_to_ptr.hbm [resolvable:$true] %s175
          %s177 = sshll.u32 %s168, 4
          %s178 = int_to_ptr.vmem [resolvable:$true] %s177
          %180 = dma.hbm_to_vmem [thread:$0]  %s176, 128, %s178, %s165
        $region20: #{tpu_custom_call.1} parent=15 // pred_fallthru
          _
        // Predicated region
        $region21: #{tpu_custom_call.1} parent=15 // pred_check
          %p181 = pneg %p84
        $region22: #{tpu_custom_call.1} parent=15 // pred_check_branch
          %183 = sbr.rel (%p181) target = $region24
        $region23: #{tpu_custom_call.1} parent=15 // pred_region
          %s184 = sand.u32 %s74, 1
          %s185 = scalar_lea.sflag [#allocation6], %s184
          %s186 = sand.u32 %s74, 1
          %s187 = smul.addr %s186, 8
          %s188 = scalar_lea.vmem [#allocation5], %s187
          %190 = vsyncadd %s185, 0
          %s191 = sadd.s32 %s30, %s29
          %s192 = smul.addr %s191, 8
          %s193 = scalar_lea.hbm %s1, %s192
          %s195 = sshll.u32 %s193, 4
          %s196 = int_to_ptr.hbm [resolvable:$true] %s195
          %s197 = sshll.u32 %s188, 4
          %s198 = int_to_ptr.vmem [resolvable:$true] %s197
          %200 = dma.hbm_to_vmem [thread:$0]  %s196, 128, %s198, %s185
        $region24: #{tpu_custom_call.1} parent=15 // pred_fallthru
          _
      $region16: #{tpu_custom_call.1} parent=5 // pred_fallthru
        _
      %p201 = scmp.le.s32.totalorder 1, %s22
      %p202 = scmp.lt.s32.totalorder %s22, 3
      %p203 = pnand %p201, %p202
      %p204 = pneg %p203
      // Predicated region
      $region25: #{tpu_custom_call.1} parent=5 // pred_check
        _
      $region26: #{tpu_custom_call.1} parent=5 // pred_check_branch
        %206 = sbr.rel (%p203) target = $region28
      $region27: #{tpu_custom_call.1} parent=5 // pred_region
        %s207 = ssub.s32 %s22, 1
        %s208 = sand.u32 %s49, 1
        %s209 = scalar_lea.sflag [#allocation3], %s208
        %s210 = sand.u32 %s49, 1
        %s211 = smul.addr %s210, 8
        %s212 = scalar_lea.vmem [#allocation2], %s211
        // Predicated region
        $region29: #{tpu_custom_call.1} parent=27 // pred_check
          %p213 = pneg %p62
        $region30: #{tpu_custom_call.1} parent=27 // pred_check_branch
          %215 = sbr.rel (%p213) target = $region32
        $region31: #{tpu_custom_call.1} parent=27 // pred_region
          %217 = dma.done %s209, 128
        $region32: #{tpu_custom_call.1} parent=27 // pred_fallthru
          _
        %s218 = sand.u32 %s77, 1
        %s219 = scalar_lea.sflag [#allocation6], %s218
        %s220 = sand.u32 %s77, 1
        %s221 = smul.addr %s220, 8
        %s222 = scalar_lea.vmem [#allocation5], %s221
        // Predicated region
        $region33: #{tpu_custom_call.1} parent=27 // pred_check
          %p223 = pneg %p90
        $region34: #{tpu_custom_call.1} parent=27 // pred_check_branch
          %225 = sbr.rel (%p223) target = $region36
        $region35: #{tpu_custom_call.1} parent=27 // pred_region
          %227 = dma.done %s219, 128
        $region36: #{tpu_custom_call.1} parent=27 // pred_fallthru
          _
        %s228 = sand.u32 %s49, 1
        %s229 = scalar_lea.sflag [#allocation3], %s228
        %s230 = sand.u32 %s49, 1
        %s231 = smul.addr %s230, 8
        %s232 = scalar_lea.vmem [#allocation2], %s231
        %p233 = pneg %p62
        %p234 = pneg %p59
        %s235 = sand.u32 %s77, 1
        %s236 = scalar_lea.sflag [#allocation6], %s235
        %s237 = sand.u32 %s77, 1
        %s238 = smul.addr %s237, 8
        %s239 = scalar_lea.vmem [#allocation5], %s238
        %p240 = pneg %p90
        %p241 = pneg %p87
        %p242 = pneg %p116
        %p243 = pneg %p113
        %s244 = sand.u32 %s103, 1
        %s245 = scalar_lea.sflag [#allocation4], %s244
        %s246 = sand.u32 %s103, 1
        %s247 = smul.addr %s246, 8
        %s248 = scalar_lea.vmem [#allocation7], %s247
        %p249 = pneg %p142
        %p250 = pneg %p139
        %s251 = sand.u32 %s129, 1
        %s252 = scalar_lea.sflag [#allocation9], %s251
        %s253 = sand.u32 %s129, 1
        %s254 = smul.addr %s253, 8
        %s255 = scalar_lea.vmem [#allocation8], %s254
        %p256 = scmp.eq.s32.totalorder %s32, 0
        // Predicated region
        $region37: #{tpu_custom_call.1} parent=27 // pred_check
          %p257 = pneg %p256
        $region38: #{tpu_custom_call.1} parent=27 // pred_check_branch
          %259 = sbr.rel (%p257) target = $region40
        $region39: #{tpu_custom_call.1} parent=27 // pred_region
          %260 = vst [vmem:[%s248] sm:$0xff] 0.0
          %261 = vst [vmem:[%s255] sm:$0xff] 0.0
        $region40: #{tpu_custom_call.1} parent=27 // pred_fallthru
          _
        %v262 = vld [vmem:[%s212] sm:$0xff]
        %v263 = vxor.u32 %v262, 2147483648
        %v264 = vmul.f32 %v263, 1.442695
        %v265 = vpow.pop %v264
        %v266 = vadd.f32 %v265, 1.0
        %v267 = vrcp.pop %v266
        %v268 = vmul.f32 %v266, %v267
        %v269 = vsub.f32 1.0, %v268
        %v270 = vmul.f32 %v267, %v269
        %v271 = vadd.f32 %v267, %v270
        %vm272 = vweird.f32 %v266
        %vm273 = vweird.f32 %v267
        %vm274 = vmor %vm272, %vm273
        %v275 = vsel %vm274, %v267, %v271
        %v276 = vand.u32 2147483647, %v266
        %vm277 = vcmp.eq.f32.partialorder %v276, 8.507059e+37
        %v278 = vand.u32 %v266, 2147483648
        %v279 = vor.u32 1.1754944e-38, %v278
        %v280 = vsel %vm277, %v279, %v275
        %v281 = vmul.f32 1.0, %v280
        %v282 = vld [vmem:[%s222] sm:$0xff]
        %v283 = vmul.f32 %v281, %v282
        %v284 = vadd.f32 %v281, %v282
        %v285 = vld [vmem:[%s248] sm:$0xff]
        %v286 = vadd.f32 %v283, 0.0
        %v287 = vadd.f32 %v285, %v286
        %288 = vst [vmem:[%s248] sm:$0xff] %v287
        %v289 = vld [vmem:[%s255] sm:$0xff]
        %v290 = vadd.f32 %v284, 0.0
        %v291 = vadd.f32 %v289, %v290
        %292 = vst [vmem:[%s255] sm:$0xff] %v291
        %s293 = sand.u32 %s103, 1
        %s294 = scalar_lea.sflag [#allocation4], %s293
        %s295 = sand.u32 %s103, 1
        %s296 = smul.addr %s295, 8
        %s297 = scalar_lea.vmem [#allocation7], %s296
        %s298 = sand.u32 %s129, 1
        %s299 = scalar_lea.sflag [#allocation9], %s298
        %s300 = sand.u32 %s129, 1
        %s301 = smul.addr %s300, 8
        %s302 = scalar_lea.vmem [#allocation8], %s301
        // Predicated region
        $region41: #{tpu_custom_call.1} parent=27 // pred_check
          %p303 = pneg %p113
        $region42: #{tpu_custom_call.1} parent=27 // pred_check_branch
          %305 = sbr.rel (%p303) target = $region44
        $region43: #{tpu_custom_call.1} parent=27 // pred_region
          %307 = vsyncadd %s294, 0
          %s308 = smul.addr %s31, 8
          %s309 = scalar_lea.hbm %s2, %s308
          %s311 = sshll.u32 %s297, 4
          %s312 = int_to_ptr.vmem [resolvable:$true] %s311
          %s313 = sshll.u32 %s309, 4
          %s314 = int_to_ptr.hbm [resolvable:$true] %s313
          %316 = dma.vmem_to_hbm [thread:$0]  %s312, 128, %s314, %s294
        $region44: #{tpu_custom_call.1} parent=27 // pred_fallthru
          _
        // Predicated region
        $region45: #{tpu_custom_call.1} parent=27 // pred_check
          %p317 = pneg %p139
        $region46: #{tpu_custom_call.1} parent=27 // pred_check_branch
          %319 = sbr.rel (%p317) target = $region48
        $region47: #{tpu_custom_call.1} parent=27 // pred_region
          %321 = vsyncadd %s299, 0
          %s322 = smul.addr %s31, 8
          %s323 = scalar_lea.hbm %s3, %s322
          %s325 = sshll.u32 %s302, 4
          %s326 = int_to_ptr.vmem [resolvable:$true] %s325
          %s327 = sshll.u32 %s323, 4
          %s328 = int_to_ptr.hbm [resolvable:$true] %s327
          %330 = dma.vmem_to_hbm [thread:$0]  %s326, 128, %s328, %s299
        $region48: #{tpu_custom_call.1} parent=27 // pred_fallthru
          _
      $region28: #{tpu_custom_call.1} parent=5 // pred_fallthru
        _
      %p331 = scmp.le.s32.totalorder 2, %s22
      // Predicated region
      $region49: #{tpu_custom_call.1} parent=5 // pred_check
        %p332 = pneg %p331
      $region50: #{tpu_custom_call.1} parent=5 // pred_check_branch
        %334 = sbr.rel (%p332) target = $region52
      $region51: #{tpu_custom_call.1} parent=5 // pred_region
        %s335 = ssub.s32 %s22, 2
        // Predicated region
        $region53: #{tpu_custom_call.1} parent=51 // pred_check
          %p336 = pneg %p119
        $region54: #{tpu_custom_call.1} parent=51 // pred_check_branch
          %338 = sbr.rel (%p336) target = $region56
        $region55: #{tpu_custom_call.1} parent=51 // pred_region
          %s339 = sand.u32 %s104, 1
          %s340 = scalar_lea.sflag [#allocation4], %s339
          %s341 = sand.u32 %s104, 1
          %s342 = smul.addr %s341, 8
          %s343 = scalar_lea.vmem [#allocation7], %s342
          %345 = dma.done %s340, 128
        $region56: #{tpu_custom_call.1} parent=51 // pred_fallthru
          _
        // Predicated region
        $region57: #{tpu_custom_call.1} parent=51 // pred_check
          %p346 = pneg %p145
        $region58: #{tpu_custom_call.1} parent=51 // pred_check_branch
          %348 = sbr.rel (%p346) target = $region60
        $region59: #{tpu_custom_call.1} parent=51 // pred_region
          %s349 = sand.u32 %s130, 1
          %s350 = scalar_lea.sflag [#allocation9], %s349
          %s351 = sand.u32 %s130, 1
          %s352 = smul.addr %s351, 8
          %s353 = scalar_lea.vmem [#allocation8], %s352
          %355 = dma.done %s350, 128
        $region60: #{tpu_custom_call.1} parent=51 // pred_fallthru
          _
      $region52: #{tpu_custom_call.1} parent=5 // pred_fallthru
        _
    $region6: #{tpu_custom_call.1} parent=1 // loop_footer
      %s26 = sadd.s32 1, %s22
    $region7: #{tpu_custom_call.1} parent=1 // loop_footer_branch
      %21 = sbr.rel target = $region3
    $region8: #{tpu_custom_call.1} parent=1 // loop_exit
      _
    %356 = vsyncpa [#allocation3], 1
    %s357 = scalar_lea.sflag [#allocation3], 1
    %358 = vsyncpa %s357, 1
    %359 = vsyncpa [#allocation6], 1
    %s360 = scalar_lea.sflag [#allocation6], 1
    %361 = vsyncpa %s360, 1
    %362 = vsyncpa [#allocation4], 1
    %s363 = scalar_lea.sflag [#allocation4], 1
    %364 = vsyncpa %s363, 1
    %365 = vsyncpa [#allocation9], 1
    %s366 = scalar_lea.sflag [#allocation9], 1
    %367 = vsyncpa %s366, 1

</llo_original>
